<compile_context>
chip_gen: v7x
topology: tpu7x:2x2x1
jax: 0.10.0
libtpu: 0.0.40
codegen_flags: <defaults>
</compile_context>

<pallas_src>
import jax
import jax.numpy as jnp
from jax.experimental import pallas as pl
from jax.experimental.pallas import tpu as pltpu


# ----------------------------------------------------------------------------
# Wrapper-side (batch-invariant) bilinear weight construction.
# ----------------------------------------------------------------------------
def _interp_matrix(scale, shift, n_out, n_in):
    """Per-axis bilinear interpolation weight matrix, shape (n_out, n_in).

    Matches F.grid_sample(mode='bilinear', padding_mode='zeros',
    align_corners=False) for a grid that along this axis is
    g = scale * base + shift, with base = linspace(-1, 1, n_out)
    (torch uses [-1] when n_out == 1, mirroring generate_homo_grid).
    """
    if n_out > 1:
        base = jnp.linspace(-1.0, 1.0, n_out, dtype=jnp.float32)
    else:
        base = jnp.array([-1.0], dtype=jnp.float32)
    g = scale * base + shift                       # normalized sample coordinate
    p = ((g + 1.0) * n_in - 1.0) * 0.5             # pixel coord, align_corners=False
    p0 = jnp.floor(p)
    f = (p - p0)[:, None]
    p0 = p0[:, None]
    iidx = jnp.arange(n_in, dtype=jnp.float32)[None, :]
    # zeros padding: out-of-range corner indices never match a real column -> 0
    return (jnp.where(iidx == p0, 1.0 - f, 0.0)
            + jnp.where(iidx == p0 + 1.0, f, 0.0))


def _pick_nb(N, H, H_out):
    """Images per grid step: amortize per-step overhead, keep >=2 steps
    (v7x megacore) when N >= 2, and keep sublane dims 8-divisible."""
    if N <= 1:
        return 1
    nb = min(8, (N + 1) // 2)
    while nb > 1 and ((nb * H) % 8 or (nb * H_out) % 8):
        nb -= 1
    if (nb * H) % 8 or (nb * H_out) % 8:
        return N   # single block: block dims equal full array dims -> always legal
    return nb


# ----------------------------------------------------------------------------
# Kernel: two fused MXU matmuls per grid step (NB images, all channels).
# ----------------------------------------------------------------------------
def _crop_kernel(wy_ref, wx_ref, x_ref, o_ref):
    # wy_ref: (NB*H_out, NB*H_in)  block-diag per-image bilinear weights along H
    # wx_ref: (C*W_in,  C*W_out)   block-diag per-channel bilinear weights along W
    # x_ref:  (NB*H_in, C*W_in)    NB images in (H, C*W) layout
    # o_ref:  (NB*H_out, C*W_out)  lane-dense output slab
    cdt = wy_ref.dtype
    t = jnp.dot(wy_ref[...], x_ref[...].astype(cdt),
                preferred_element_type=jnp.float32)            # (NB*H_out, C*W_in)
    o = jnp.dot(t.astype(cdt), wx_ref[...],
                preferred_element_type=jnp.float32)            # (NB*H_out, C*W_out)
    o_ref[...] = o.astype(o_ref.dtype)


# ----------------------------------------------------------------------------
# Public wrapper: Pallas equivalent of CropTransfromation(height, width)(x, rois)
# ----------------------------------------------------------------------------
def crop_transformation(x, rois, height=32, width=96):
    N, C, H, W = x.shape
    H_out, W_out = height, width

    NB = _pick_nb(N, H, H_out)
    num_blocks = -(-N // NB)
    N_pad = num_blocks * NB

    rois = rois.astype(jnp.float32)
    x1, y1, x2, y2 = rois[0], rois[1], rois[2], rois[3]

    # rotate2theta (identical for every batch element, as in the PyTorch code)
    t00 = (x2 - x1) / (W - 1)
    t02 = (x1 + x2 - W + 1) / (W - 1)
    t11 = (y2 - y1) / (H - 1)
    t12 = (y1 + y2 - H + 1) / (H - 1)

    # bf16 weights when the data is bf16 (f32 MXU accumulation), else pure f32.
    cdt = jnp.bfloat16 if x.dtype == jnp.bfloat16 else jnp.float32

    wy = _interp_matrix(t11, t12, H_out, H)            # (H_out, H_in)
    wxT = _interp_matrix(t00, t02, W_out, W).T          # (W_in, W_out)
    # Block-diagonal fusions (computed once, outside the kernel).
    wy_bd = jnp.kron(jnp.eye(NB, dtype=jnp.float32), wy).astype(cdt)   # (NB*H_out, NB*H_in)
    wx_bd = jnp.kron(jnp.eye(C, dtype=jnp.float32), wxT).astype(cdt)   # (C*W_in, C*W_out)

    # (N, C, H, W) -> (N, H, C*W): contiguous per-image DMA, channel-fused layout.
    x_r = jnp.transpose(x, (0, 2, 1, 3)).reshape(N, H, C * W)
    if N_pad != N:
        x_r = jnp.pad(x_r, ((0, N_pad - N), (0, 0), (0, 0)))
    x_2d = x_r.reshape(N_pad * H, C * W)

    out_2d = pl.pallas_call(
        _crop_kernel,
        out_shape=jax.ShapeDtypeStruct((N_pad * H_out, C * W_out), x.dtype),
        grid_spec=pltpu.PrefetchScalarGridSpec(
            num_scalar_prefetch=0,
            grid=(num_blocks,),
            in_specs=[
                pl.BlockSpec((NB * H_out, NB * H), lambda i: (0, 0)),
                pl.BlockSpec((C * W, C * W_out), lambda i: (0, 0)),
                pl.BlockSpec((NB * H, C * W), lambda i: (i, 0)),
            ],
            out_specs=pl.BlockSpec((NB * H_out, C * W_out), lambda i: (i, 0)),
        ),
        compiler_params=pltpu.CompilerParams(
            dimension_semantics=("parallel",)),
    )(wy_bd, wx_bd, x_2d)

    # (N_pad*H_out, C*W_out) -> (N, C, H_out, W_out)
    out = out_2d.reshape(N_pad, H_out, C, W_out)[:N]
    return jnp.transpose(out, (0, 2, 1, 3))

    # TODO(synk): the PyTorch forward also does `print(homo_grid)` and builds an
    # unused torch.rand tensor; both are side effects with no effect on the output.


# ----------------------------------------------------------------------------
# Pure-JAX reference (gather-based grid_sample) used only for verification.
# ----------------------------------------------------------------------------
def _ref_forward(x, rois, height, width):
    N, C, H, W = x.shape
    x1, y1, x2, y2 = rois
    t00 = (x2 - x1) / (W - 1)
    t02 = (x1 + x2 - W + 1) / (W - 1)
    t11 = (y2 - y1) / (H - 1)
    t12 = (y1 + y2 - H + 1) / (H - 1)
    bx = jnp.linspace(-1.0, 1.0, width)
    by = jnp.linspace(-1.0, 1.0, height)
    gx = jnp.broadcast_to(t00 * bx[None, :] + t02, (height, width))
    gy = jnp.broadcast_to(t11 * by[:, None] + t12, (height, width))
    ix = ((gx + 1.0) * W - 1.0) / 2.0
    iy = ((gy + 1.0) * H - 1.0) / 2.0
    x0 = jnp.floor(ix)
    y0 = jnp.floor(iy)
    fx = ix - x0
    fy = iy - y0

    def sample(xi, yi, wgt):
        valid = (xi >= 0) & (xi < W) & (yi >= 0) & (yi < H)
        xic = jnp.clip(xi, 0, W - 1).astype(jnp.int32)
        yic = jnp.clip(yi, 0, H - 1).astype(jnp.int32)
        v = x[:, :, yic, xic]                       # (N, C, height, width)
        return v * (wgt * valid)[None, None]

    return (sample(x0, y0, (1 - fx) * (1 - fy))
            + sample(x0 + 1, y0, fx * (1 - fy))
            + sample(x0, y0 + 1, (1 - fx) * fy)
            + sample(x0 + 1, y0 + 1, fx * fy))


if __name__ == "__main__":
    key = jax.random.PRNGKey(0)
    N, C, H, W = 2, 4, 16, 16
    x = jax.random.normal(key, (N, C, H, W), dtype=jnp.float32)
    # rois = (x1, y1, x2, y2) in input pixel coordinates (shared across batch)
    rois = jnp.array([2.0, 3.0, 13.0, 12.0], dtype=jnp.float32)

    out = crop_transformation(x, rois, height=32, width=96)
    out = jax.block_until_ready(out)

    assert out.shape == (N, C, 32, 96)
    ref = _ref_forward(x, rois, 32, 96)
    assert jnp.allclose(out, ref, atol=1e-4, rtol=1e-4), "mismatch vs reference"

    print("KERNEL_OK")
</pallas_src>

<mosaic_0001>
module attributes {stable_mosaic.version = 11 : i64} {
  func.func @_crop_kernel(%arg0: i32, %arg1: memref<32x16xf32, #tpu.memory_space<vmem>>, %arg2: memref<64x384xf32, #tpu.memory_space<vmem>>, %arg3: memref<16x64xf32, #tpu.memory_space<vmem>>, %arg4: memref<32x384xf32, #tpu.memory_space<vmem>>) attributes {dimension_semantics = [#tpu.dimension_semantics<parallel>], iteration_bounds = array<i64: 2>, scalar_prefetch = 0 : i64, scratch_operands = 0 : i64, tpu.core_type = #tpu.core_type<tc>, window_params = [{pipeline_mode = #tpu.pipeline_mode<synchronous>, transform_indices = @transform_0, window_bounds = array<i64: 32, 16>}, {pipeline_mode = #tpu.pipeline_mode<synchronous>, transform_indices = @transform_1, window_bounds = array<i64: 64, 384>}, {transform_indices = @transform_2, window_bounds = array<i64: 16, 64>}, {transform_indices = @transform_3, window_bounds = array<i64: 32, 384>}]} {
    %c0 = arith.constant 0 : index
    %c0_0 = arith.constant 0 : index
    %0 = vector.load %arg1[%c0, %c0_0] : memref<32x16xf32, #tpu.memory_space<vmem>>, vector<32x16xf32>
    %c0_1 = arith.constant 0 : index
    %c0_2 = arith.constant 0 : index
    %1 = vector.load %arg3[%c0_1, %c0_2] : memref<16x64xf32, #tpu.memory_space<vmem>>, vector<16x64xf32>
    %cst = arith.constant dense<0.000000e+00> : vector<32x64xf32>
    %2 = tpu.matmul %0, %1, %cst {dimension_numbers = #tpu.dot_dimension_numbers<[1], [0], [0], [1], [0, 0, 1, 1], [], []>} : vector<32x16xf32>, vector<16x64xf32>, vector<32x64xf32> -> vector<32x64xf32>
    %c0_3 = arith.constant 0 : index
    %c0_4 = arith.constant 0 : index
    %3 = vector.load %arg2[%c0_3, %c0_4] : memref<64x384xf32, #tpu.memory_space<vmem>>, vector<64x384xf32>
    %cst_5 = arith.constant dense<0.000000e+00> : vector<32x384xf32>
    %4 = tpu.matmul %2, %3, %cst_5 {dimension_numbers = #tpu.dot_dimension_numbers<[1], [0], [0], [1], [0, 0, 1, 1], [], []>} : vector<32x64xf32>, vector<64x384xf32>, vector<32x384xf32> -> vector<32x384xf32>
    %c0_6 = arith.constant 0 : index
    %c0_7 = arith.constant 0 : index
    %5 = vector.load %arg4[%c0_6, %c0_7] : memref<32x384xf32, #tpu.memory_space<vmem>>, vector<32x384xf32>
    tpu.vector_store %arg4[%c0_6, %c0_7], %4 {strides = array<i32>} : memref<32x384xf32, #tpu.memory_space<vmem>>, vector<32x384xf32>,
    return
  }
  func.func @transform_0(%arg0: i32) -> (i32, i32) {
    %c0_i32 = arith.constant 0 : i32
    %c0_i32_0 = arith.constant 0 : i32
    %c0_i32_1 = arith.constant 0 : i32
    return %c0_i32, %c0_i32_0 : i32, i32
  }
  func.func @transform_1(%arg0: i32) -> (i32, i32) {
    %c0_i32 = arith.constant 0 : i32
    %c0_i32_0 = arith.constant 0 : i32
    %c0_i32_1 = arith.constant 0 : i32
    return %c0_i32, %c0_i32_0 : i32, i32
  }
  func.func @transform_2(%arg0: i32) -> (i32, i32) {
    %c0_i32 = arith.constant 0 : i32
    %c0_i32_0 = arith.constant 0 : i32
    return %arg0, %c0_i32 : i32, i32
  }
  func.func @transform_3(%arg0: i32) -> (i32, i32) {
    %c0_i32 = arith.constant 0 : i32
    %c0_i32_0 = arith.constant 0 : i32
    return %arg0, %c0_i32 : i32, i32
  }
}

</mosaic_0001>

<llo_original>
// kernel: tpu_custom_call.1
$region0: #{tpu_custom_call.1}
  #allocation0 [shape = 'u32[]', space=smem, size = 0x4, offset = 0x4, fixed_abs, tag = 'smem constant byte address 0x4 - core index']
  #allocation1 [shape = 'u32[144,128]{1,0:T(1,128)}', space=vmem, size = 0x12000, scoped, tag = 'internal scratch']
  %s0 = inlined_call_operand.vmem [shape: f32[32,16], index: 0, kind: input, shape index: {}]
  %s1 = inlined_call_operand.hbm [shape: f32[64,384], index: 1, kind: input, shape index: {}]
  %s2 = inlined_call_operand.vmem [shape: f32[32,64], index: 2, kind: input, shape index: {}]
  %s3 = inlined_call_operand.hbm [shape: f32[64,384], index: 3, kind: output, shape index: {}]
  %s4 = sld [smem:[#allocation0]]
  $region49: #{tpu_custom_call.1} parent=0
    _
  %s6 = ssub.s32 1, %s4
  %s7 = scalar_select 0, %s6, %s4
  $region1: #{tpu_custom_call.1} parent=0
    #allocation2 [shape = 'u8[98304]{0}', space=vmem, size = 0x18000, scoped, tag = 'input window, operand 1, single buffered']
    #allocation3 [shape = 's32[2]{0}', space=sflag, size = 0x8, scoped, tag = 'scoped memory for tpu_custom_call.1']
    #allocation4 [shape = 's32[2]{0}', space=sflag, size = 0x8, scoped, tag = 'scoped memory for tpu_custom_call.1']
    #allocation5 [shape = 'u8[98304]{0}', space=vmem, size = 0x18000, scoped, tag = 'output window, operand 0']
    %8 = vsyncpa [#allocation3], 0
    %9 = vsyncpa [#allocation4], 0
    %s10 = scalar_lea.sflag [#allocation4], 1
    %11 = vsyncpa %s10, 0
    loop: start=0, step=1, limit=4
    $region2: #{tpu_custom_call.1} parent=1 // loop_pre_header
      _
    $region3: #{tpu_custom_call.1} parent=1 // loop_header
      %s13 = sphi 0, %s17
      %p14 = scmp.ge.s32.totalorder %s13, 4
      %s21 = sphi 0, %s21
      %s23 = sphi 0, %s21
      %s24 = sphi 0, %s23
      %s38 = sphi 0, %s24
      %s42 = sphi 0, %s42
      %s44 = sphi 0, %s42
      %s45 = sphi 0, %s44
      %s59 = sphi 0, %s45
      %s65 = sphi 0, %s67
      %s68 = sphi 0, %s65
      %s69 = sphi 0, %s68
      %s85 = sphi 0, %s69
      %s91 = sphi 0, %s93
      %s94 = sphi 0, %s91
      %s95 = sphi 0, %s94
      %s111 = sphi 0, %s95
    $region4: #{tpu_custom_call.1} parent=1 // loop_header_branch
      %16 = sbr.rel (%p14) target = $region8
    $region5: #{tpu_custom_call.1} parent=1 // loop_body
      %s18 = ssub.s32 %s13, 1
      %s19 = ssub.s32 %s13, 2
      %s20 = sadd.s32 %s13, 1
      %s22 = sadd.s32 %s21, 1
      %p25 = scmp.eq.s32.totalorder %s13, 1
      %p26 = scmp.ne.s32.totalorder %s21, %s23
      %p27 = scmp.eq.s32.totalorder %s13, 0
      %p28 = por %p26, %p27
      %p29 = scmp.ne.s32.totalorder %s21, %s23
      %p30 = scmp.eq.s32.totalorder %s18, 1
      %p31 = por %p29, %p30
      %p32 = scmp.ne.s32.totalorder %s23, %s24
      %p33 = scmp.eq.s32.totalorder %s18, 0
      %p34 = por %p32, %p33
      %p35 = scmp.ne.s32.totalorder %s23, %s24
      %p36 = scmp.eq.s32.totalorder %s19, 1
      %p37 = por %p35, %p36
      %p39 = scmp.ne.s32.totalorder %s24, %s38
      %p40 = scmp.eq.s32.totalorder %s19, 0
      %p41 = por %p39, %p40
      %s43 = sadd.s32 %s42, 1
      %p46 = scmp.eq.s32.totalorder %s13, 1
      %p47 = scmp.ne.s32.totalorder %s42, %s44
      %p48 = scmp.eq.s32.totalorder %s13, 0
      %p49 = por %p47, %p48
      %p50 = scmp.ne.s32.totalorder %s42, %s44
      %p51 = scmp.eq.s32.totalorder %s18, 1
      %p52 = por %p50, %p51
      %p53 = scmp.ne.s32.totalorder %s44, %s45
      %p54 = scmp.eq.s32.totalorder %s18, 0
      %p55 = por %p53, %p54
      %p56 = scmp.ne.s32.totalorder %s44, %s45
      %p57 = scmp.eq.s32.totalorder %s19, 1
      %p58 = por %p56, %p57
      %p60 = scmp.ne.s32.totalorder %s45, %s59
      %p61 = scmp.eq.s32.totalorder %s19, 0
      %p62 = por %p60, %p61
      %s63 = ssub.s32 %s13, %s20
      %p64 = scmp.eq.s32.totalorder %s63, 0
      %s66 = sadd.s32 %s65, 1
      %s67 = scalar_select %p64, %s65, %s66
      %p70 = pneg %p64
      %p71 = scmp.eq.s32.totalorder %s13, 1
      %p72 = por %p70, %p71
      %p73 = scmp.ne.s32.totalorder %s65, %s68
      %p74 = scmp.eq.s32.totalorder %s13, 0
      %p75 = por %p73, %p74
      %p76 = scmp.ne.s32.totalorder %s65, %s68
      %p77 = scmp.eq.s32.totalorder %s18, 1
      %p78 = por %p76, %p77
      %p79 = scmp.ne.s32.totalorder %s68, %s69
      %p80 = scmp.eq.s32.totalorder %s18, 0
      %p81 = por %p79, %p80
      %p82 = scmp.ne.s32.totalorder %s68, %s69
      %p83 = scmp.eq.s32.totalorder %s19, 1
      %p84 = por %p82, %p83
      %p86 = scmp.ne.s32.totalorder %s69, %s85
      %p87 = scmp.eq.s32.totalorder %s19, 0
      %p88 = por %p86, %p87
      %s89 = ssub.s32 %s13, %s20
      %p90 = scmp.eq.s32.totalorder %s89, 0
      %s92 = sadd.s32 %s91, 1
      %s93 = scalar_select %p90, %s91, %s92
      %p96 = pneg %p90
      %p97 = scmp.eq.s32.totalorder %s13, 1
      %p98 = por %p96, %p97
      %p99 = scmp.ne.s32.totalorder %s91, %s94
      %p100 = scmp.eq.s32.totalorder %s13, 0
      %p101 = por %p99, %p100
      %p102 = scmp.ne.s32.totalorder %s91, %s94
      %p103 = scmp.eq.s32.totalorder %s18, 1
      %p104 = por %p102, %p103
      %p105 = scmp.ne.s32.totalorder %s94, %s95
      %p106 = scmp.eq.s32.totalorder %s18, 0
      %p107 = por %p105, %p106
      %p108 = scmp.ne.s32.totalorder %s94, %s95
      %p109 = scmp.eq.s32.totalorder %s19, 1
      %p110 = por %p108, %p109
      %p112 = scmp.ne.s32.totalorder %s95, %s111
      %p113 = scmp.eq.s32.totalorder %s19, 0
      %p114 = por %p112, %p113
      %p115 = scmp.le.s32.totalorder 1, %s13
      %p116 = scmp.lt.s32.totalorder %s13, 3
      %p117 = pnand %p115, %p116
      %p118 = pneg %p117
      // Predicated region
      $region9: #{tpu_custom_call.1} parent=5 // pred_check
        _
      $region10: #{tpu_custom_call.1} parent=5 // pred_check_branch
        %120 = sbr.rel (%p117) target = $region12
      $region11: #{tpu_custom_call.1} parent=5 // pred_region
        %s121 = ssub.s32 %s13, 1
        // Predicated region
        $region13: #{tpu_custom_call.1} parent=11 // pred_check
          %p122 = pneg %p34
        $region14: #{tpu_custom_call.1} parent=11 // pred_check_branch
          %124 = sbr.rel (%p122) target = $region16
        $region15: #{tpu_custom_call.1} parent=11 // pred_region
          _
        $region16: #{tpu_custom_call.1} parent=11 // pred_fallthru
          _
        // Predicated region
        $region17: #{tpu_custom_call.1} parent=11 // pred_check
          %p125 = pneg %p55
        $region18: #{tpu_custom_call.1} parent=11 // pred_check_branch
          %127 = sbr.rel (%p125) target = $region20
        $region19: #{tpu_custom_call.1} parent=11 // pred_region
          %s129 = ssub.s32 3072, 3072
          %130 = vsyncadd [#allocation3], %s129
          %s131 = sshll.u32 [#allocation2], 4
          %s132 = int_to_ptr.vmem [resolvable:$true] %s131
          %137 = dma.hbm_to_vmem [thread:$0]  %s1, 3072, %s132, [#allocation3], 384, 384, 24
        $region20: #{tpu_custom_call.1} parent=11 // pred_fallthru
          _
      $region12: #{tpu_custom_call.1} parent=5 // pred_fallthru
        _
      %p138 = scmp.lt.s32.totalorder %s13, 2
      // Predicated region
      $region21: #{tpu_custom_call.1} parent=5 // pred_check
        %p139 = pneg %p138
      $region22: #{tpu_custom_call.1} parent=5 // pred_check_branch
        %141 = sbr.rel (%p139) target = $region24
      $region23: #{tpu_custom_call.1} parent=5 // pred_region
        // Predicated region
        $region25: #{tpu_custom_call.1} parent=23 // pred_check
          %p142 = pneg %p75
        $region26: #{tpu_custom_call.1} parent=23 // pred_check_branch
          %144 = sbr.rel (%p142) target = $region28
        $region27: #{tpu_custom_call.1} parent=23 // pred_region
          %s145 = smul.u32 2, %s13
          %p146 = scmp.lt.s32.totalorder %s145, 3
          %s147 = scalar_select %p146, %s145, 3
          %s148 = smul.addr %s147, 8
          %s149 = scalar_lea.vmem %s2, %s148
          %s150 = smul.u32 2, %s13
        $region28: #{tpu_custom_call.1} parent=23 // pred_fallthru
          _
      $region24: #{tpu_custom_call.1} parent=5 // pred_fallthru
        _
      %p151 = scmp.le.s32.totalorder 1, %s13
      %p152 = scmp.lt.s32.totalorder %s13, 3
      %p153 = pnand %p151, %p152
      %p154 = pneg %p153
      // Predicated region
      $region29: #{tpu_custom_call.1} parent=5 // pred_check
        _
      $region30: #{tpu_custom_call.1} parent=5 // pred_check_branch
        %156 = sbr.rel (%p153) target = $region32
      $region31: #{tpu_custom_call.1} parent=5 // pred_region
        %s157 = ssub.s32 %s13, 1
        // Predicated region
        $region33: #{tpu_custom_call.1} parent=31 // pred_check
          %p158 = pneg %p55
        $region34: #{tpu_custom_call.1} parent=31 // pred_check_branch
          %160 = sbr.rel (%p158) target = $region36
        $region35: #{tpu_custom_call.1} parent=31 // pred_region
          %161 = dma.done [#allocation3], 3072
        $region36: #{tpu_custom_call.1} parent=31 // pred_fallthru
          _
        %p162 = pneg %p34
        %p163 = pneg %p31
        %p164 = pneg %p55
        %p165 = pneg %p52
        %s166 = smul.u32 2, %s18
        %p167 = scmp.lt.s32.totalorder %s166, 3
        %s168 = scalar_select %p167, %s166, 3
        %s169 = smul.addr %s168, 8
        %s170 = scalar_lea.vmem %s2, %s169
        %p171 = pneg %p81
        %p172 = pneg %p78
        %p173 = pneg %p107
        %p174 = pneg %p104
        %s175 = sand.u32 %s94, 1
        %s176 = scalar_lea.sflag [#allocation4], %s175
        %s177 = sand.u32 %s94, 1
        %s178 = smul.addr %s177, 96
        %s179 = scalar_lea.vmem [#allocation5], %s178
        %s180 = smul.u32 2, %s18
        %p181 = scmp.lt.s32.totalorder %s180, 3
        %s182 = scalar_select %p181, %s180, 3
        %s183 = smul.addr %s182, 8
        %s184 = scalar_lea.vmem %s2, %s183
        %s185 = smul.u32 2, %s18
        %s186 = smul.u32 4, %s18
        %v187 = vld [vmem:[%s0] sm:$0xff]
        %v188 = vld [vmem:[%s0 + $0x8] sm:$0xff]
        %v189 = vld [vmem:[%s0 + $0x10] sm:$0xff]
        %v190 = vld [vmem:[%s0 + $0x18] sm:$0xff]
        %v191 = vld [vmem:[%s184] sm:$0xff]
        %v192 = vld [vmem:[%s184 + $0x8] sm:$0xff]
        %vm193 = vcmask 130048
        %v195 = vsel %vm193, %v187, 0
        %v198 = vsel %vm193, %v188, 0
        %v201 = vsel %vm193, %v189, 0
        %v204 = vsel %vm193, %v190, 0
        %206 = vmatprep.subr.mxu0 0.0
        %207 = vmatpush1.msra.mxu0 %v191
        %208 = vmatprep.subr.mxu0 0.0
        %209 = vmatpush1.msra.mxu0 %v192
        %210 = vmatprep.subr.mxu0 0.0
        %211 = vmatpush1.msra.mxu0 0.0
        %212 = vmatprep.subr.mxu0 0.0
        %213 = vmatpush1.msra.mxu0 0.0
        %214 = vmatprep.subr.mxu0 0.0
        %215 = vmatpush1.msra.mxu0 0.0
        %216 = vmatprep.subr.mxu0 0.0
        %217 = vmatpush1.msra.mxu0 0.0
        %218 = vmatprep.subr.mxu0 0.0
        %219 = vmatpush1.msra.mxu0 0.0
        %220 = vmatprep.subr.mxu0 0.0
        %221 = vmatpush1.msra.mxu0 0.0
        %222 = vmatprep.subr.mxu0 0.0
        %223 = vmatpush1.msra.mxu0 0.0
        %224 = vmatprep.subr.mxu0 0.0
        %225 = vmatpush1.msra.mxu0 0.0
        %226 = vmatprep.subr.mxu0 0.0
        %227 = vmatpush1.msra.mxu0 0.0
        %228 = vmatprep.subr.mxu0 0.0
        %229 = vmatpush1.msra.mxu0 0.0
        %230 = vmatprep.subr.mxu0 0.0
        %231 = vmatpush1.msra.mxu0 0.0
        %232 = vmatprep.subr.mxu0 0.0
        %233 = vmatpush1.msra.mxu0 0.0
        %234 = vmatprep.subr.mxu0 0.0
        %235 = vmatpush1.msra.mxu0 0.0
        %236 = vmatprep.subr.mxu0 0.0
        %237 = vmatpush1.msra.mxu0 0.0
        %238 = vmatprep.subr.mxu0 0.0
        %239 = vmatpush1.msra.mxu0 0.0
        %240 = vmatprep.subr.mxu0 0.0
        %241 = vmatpush1.msra.mxu0 0.0
        %242 = vmatprep.subr.mxu0 0.0
        %243 = vmatpush1.msra.mxu0 0.0
        %244 = vmatprep.subr.mxu0 0.0
        %245 = vmatpush1.msra.mxu0 0.0
        %246 = vmatprep.subr.mxu0 0.0
        %247 = vmatpush1.msra.mxu0 0.0
        %248 = vmatprep.subr.mxu0 0.0
        %249 = vmatpush1.msra.mxu0 0.0
        %250 = vmatprep.subr.mxu0 0.0
        %251 = vmatpush1.msra.mxu0 0.0
        %252 = vmatprep.subr.mxu0 0.0
        %253 = vmatpush1.msra.mxu0 0.0
        %254 = vmatprep.subr.mxu0 0.0
        %255 = vmatpush1.msra.mxu0 0.0
        %256 = vmatprep.subr.mxu0 0.0
        %257 = vmatpush1.msra.mxu0 0.0
        %258 = vmatprep.subr.mxu0 0.0
        %259 = vmatpush1.msra.mxu0 0.0
        %260 = vmatprep.subr.mxu0 0.0
        %261 = vmatpush1.msra.mxu0 0.0
        %262 = vmatprep.subr.mxu0 0.0
        %263 = vmatpush1.msra.mxu0 0.0
        %264 = vmatprep.subr.mxu0 0.0
        %265 = vmatpush1.msra.mxu0 0.0
        %266 = vmatprep.subr.mxu0 0.0
        %267 = vmatpush1.msra.mxu0 0.0
        %268 = vmatprep.subr.mxu0 0.0
        %269 = vmatpush1.msra.mxu0 0.0
        %270 = vmatprep.mubr.f32.mxu0 0.0
        %271 = vmatmul.mubr.f32.gmra.mrb[0].mxu0 %v195
        %v272 = vpop.f32.mrb[0].mxu0
        %v273 = vadd.f32 0.0, %v272
        %v274 = vpop.f32.mrb[0].mxu0
        %275 = vmatprep.mubr.f32.mxu0 0.0
        %276 = vmatmul.mubr.f32.gmra.mrb[0].mxu0 %v198
        %v277 = vpop.f32.mrb[0].mxu0
        %v278 = vadd.f32 0.0, %v277
        %v279 = vpop.f32.mrb[0].mxu0
        %280 = vmatprep.mubr.f32.mxu0 0.0
        %281 = vmatmul.mubr.f32.gmra.mrb[0].mxu0 %v201
        %v282 = vpop.f32.mrb[0].mxu0
        %v283 = vadd.f32 0.0, %v282
        %v284 = vpop.f32.mrb[0].mxu0
        %285 = vmatprep.mubr.f32.mxu0 0.0
        %286 = vmatmul.mubr.f32.gmra.mrb[0].mxu0 %v204
        %v287 = vpop.f32.mrb[0].mxu0
        %v288 = vadd.f32 0.0, %v287
        %v289 = vpop.f32.mrb[0].mxu0
        %290 = vdwg.mxu0
        %v291 = vld [vmem:[#allocation2] sm:$0xff]
        %v292 = vld [vmem:[#allocation2 + $0x8] sm:$0xff]
        %v293 = vld [vmem:[#allocation2 + $0x10] sm:$0xff]
        %v294 = vld [vmem:[#allocation2 + $0x18] sm:$0xff]
        %v295 = vld [vmem:[#allocation2 + $0x20] sm:$0xff]
        %v296 = vld [vmem:[#allocation2 + $0x28] sm:$0xff]
        %v297 = vld [vmem:[#allocation2 + $0x30] sm:$0xff]
        %v298 = vld [vmem:[#allocation2 + $0x38] sm:$0xff]
        %v299 = vld [vmem:[#allocation2 + $0x40] sm:$0xff]
        %v300 = vld [vmem:[#allocation2 + $0x48] sm:$0xff]
        %v301 = vld [vmem:[#allocation2 + $0x50] sm:$0xff]
        %v302 = vld [vmem:[#allocation2 + $0x58] sm:$0xff]
        %v303 = vld [vmem:[#allocation2 + $0x60] sm:$0xff]
        %v304 = vld [vmem:[#allocation2 + $0x68] sm:$0xff]
        %v305 = vld [vmem:[#allocation2 + $0x70] sm:$0xff]
        %v306 = vld [vmem:[#allocation2 + $0x78] sm:$0xff]
        %v307 = vld [vmem:[#allocation2 + $0x80] sm:$0xff]
        %v308 = vld [vmem:[#allocation2 + $0x88] sm:$0xff]
        %v309 = vld [vmem:[#allocation2 + $0x90] sm:$0xff]
        %v310 = vld [vmem:[#allocation2 + $0x98] sm:$0xff]
        %v311 = vld [vmem:[#allocation2 + $0xa0] sm:$0xff]
        %v312 = vld [vmem:[#allocation2 + $0xa8] sm:$0xff]
        %v313 = vld [vmem:[#allocation2 + $0xb0] sm:$0xff]
        %v314 = vld [vmem:[#allocation2 + $0xb8] sm:$0xff]
        %vm315 = vcmask 523264
        %v317 = vsel %vm315, %v273, 0
        %v320 = vsel %vm315, %v278, 0
        %v323 = vsel %vm315, %v283, 0
        %v326 = vsel %vm315, %v288, 0
        %328 = vmatprep.subr.mxu0 %v292
        %329 = vmatpush1.msra.mxu0 %v291
        %330 = vmatprep.subr.mxu0 %v295
        %331 = vmatpush1.msra.mxu0 %v294
        %332 = vmatprep.subr.mxu0 %v298
        %333 = vmatpush1.msra.mxu0 %v297
        %334 = vmatprep.subr.mxu0 %v301
        %335 = vmatpush1.msra.mxu0 %v300
        %336 = vmatprep.subr.mxu0 %v304
        %337 = vmatpush1.msra.mxu0 %v303
        %338 = vmatprep.subr.mxu0 %v307
        %339 = vmatpush1.msra.mxu0 %v306
        %340 = vmatprep.subr.mxu0 %v310
        %341 = vmatpush1.msra.mxu0 %v309
        %342 = vmatprep.subr.mxu0 %v313
        %343 = vmatpush1.msra.mxu0 %v312
        %344 = vmatprep.subr.mxu0 0.0
        %345 = vmatpush1.msra.mxu0 0.0
        %346 = vmatprep.subr.mxu0 0.0
        %347 = vmatpush1.msra.mxu0 0.0
        %348 = vmatprep.subr.mxu0 0.0
        %349 = vmatpush1.msra.mxu0 0.0
        %350 = vmatprep.subr.mxu0 0.0
        %351 = vmatpush1.msra.mxu0 0.0
        %352 = vmatprep.subr.mxu0 0.0
        %353 = vmatpush1.msra.mxu0 0.0
        %354 = vmatprep.subr.mxu0 0.0
        %355 = vmatpush1.msra.mxu0 0.0
        %356 = vmatprep.subr.mxu0 0.0
        %357 = vmatpush1.msra.mxu0 0.0
        %358 = vmatprep.subr.mxu0 0.0
        %359 = vmatpush1.msra.mxu0 0.0
        %360 = vmatprep.subr.mxu0 0.0
        %361 = vmatpush1.msra.mxu0 0.0
        %362 = vmatprep.subr.mxu0 0.0
        %363 = vmatpush1.msra.mxu0 0.0
        %364 = vmatprep.subr.mxu0 0.0
        %365 = vmatpush1.msra.mxu0 0.0
        %366 = vmatprep.subr.mxu0 0.0
        %367 = vmatpush1.msra.mxu0 0.0
        %368 = vmatprep.subr.mxu0 0.0
        %369 = vmatpush1.msra.mxu0 0.0
        %370 = vmatprep.subr.mxu0 0.0
        %371 = vmatpush1.msra.mxu0 0.0
        %372 = vmatprep.subr.mxu0 0.0
        %373 = vmatpush1.msra.mxu0 0.0
        %374 = vmatprep.subr.mxu0 0.0
        %375 = vmatpush1.msra.mxu0 0.0
        %376 = vmatprep.subr.mxu0 0.0
        %377 = vmatpush1.msra.mxu0 0.0
        %378 = vmatprep.subr.mxu0 0.0
        %379 = vmatpush1.msra.mxu0 0.0
        %380 = vmatprep.subr.mxu0 0.0
        %381 = vmatpush1.msra.mxu0 0.0
        %382 = vmatprep.subr.mxu0 0.0
        %383 = vmatpush1.msra.mxu0 0.0
        %384 = vmatprep.subr.mxu0 0.0
        %385 = vmatpush1.msra.mxu0 0.0
        %386 = vmatprep.subr.mxu0 0.0
        %387 = vmatpush1.msra.mxu0 0.0
        %388 = vmatprep.subr.mxu0 0.0
        %389 = vmatpush1.msra.mxu0 0.0
        %390 = vmatprep.subr.mxu0 0.0
        %391 = vmatpush1.msra.mxu0 0.0
        %392 = vmatprep.mubr.f32.mxu0 0.0
        %393 = vmatmul.mubr.f32.gmra.mrb[0].mxu0 %v317
        %v394 = vpop.f32.mrb[0].mxu0
        %v395 = vadd.f32 0.0, %v394
        %v396 = vpop.f32.mrb[0].mxu0
        %v397 = vadd.f32 0.0, %v396
        %398 = vmatprep.mubr.f32.mxu0 0.0
        %399 = vmatmul.mubr.f32.gmra.mrb[0].mxu0 %v320
        %v400 = vpop.f32.mrb[0].mxu0
        %v401 = vadd.f32 0.0, %v400
        %v402 = vpop.f32.mrb[0].mxu0
        %v403 = vadd.f32 0.0, %v402
        %404 = vmatprep.mubr.f32.mxu0 0.0
        %405 = vmatmul.mubr.f32.gmra.mrb[0].mxu0 %v323
        %v406 = vpop.f32.mrb[0].mxu0
        %v407 = vadd.f32 0.0, %v406
        %v408 = vpop.f32.mrb[0].mxu0
        %v409 = vadd.f32 0.0, %v408
        %410 = vmatprep.mubr.f32.mxu0 0.0
        %411 = vmatmul.mubr.f32.gmra.mrb[0].mxu0 %v326
        %v412 = vpop.f32.mrb[0].mxu0
        %v413 = vadd.f32 0.0, %v412
        %v414 = vpop.f32.mrb[0].mxu0
        %v415 = vadd.f32 0.0, %v414
        %416 = vdwg.mxu0
        %417 = vmatprep.subr.mxu0 0.0
        %418 = vmatpush1.msra.mxu0 %v293
        %419 = vmatprep.subr.mxu0 0.0
        %420 = vmatpush1.msra.mxu0 %v296
        %421 = vmatprep.subr.mxu0 0.0
        %422 = vmatpush1.msra.mxu0 %v299
        %423 = vmatprep.subr.mxu0 0.0
        %424 = vmatpush1.msra.mxu0 %v302
        %425 = vmatprep.subr.mxu0 0.0
        %426 = vmatpush1.msra.mxu0 %v305
        %427 = vmatprep.subr.mxu0 0.0
        %428 = vmatpush1.msra.mxu0 %v308
        %429 = vmatprep.subr.mxu0 0.0
        %430 = vmatpush1.msra.mxu0 %v311
        %431 = vmatprep.subr.mxu0 0.0
        %432 = vmatpush1.msra.mxu0 %v314
        %433 = vmatprep.subr.mxu0 0.0
        %434 = vmatpush1.msra.mxu0 0.0
        %435 = vmatprep.subr.mxu0 0.0
        %436 = vmatpush1.msra.mxu0 0.0
        %437 = vmatprep.subr.mxu0 0.0
        %438 = vmatpush1.msra.mxu0 0.0
        %439 = vmatprep.subr.mxu0 0.0
        %440 = vmatpush1.msra.mxu0 0.0
        %441 = vmatprep.subr.mxu0 0.0
        %442 = vmatpush1.msra.mxu0 0.0
        %443 = vmatprep.subr.mxu0 0.0
        %444 = vmatpush1.msra.mxu0 0.0
        %445 = vmatprep.subr.mxu0 0.0
        %446 = vmatpush1.msra.mxu0 0.0
        %447 = vmatprep.subr.mxu0 0.0
        %448 = vmatpush1.msra.mxu0 0.0
        %449 = vmatprep.subr.mxu0 0.0
        %450 = vmatpush1.msra.mxu0 0.0
        %451 = vmatprep.subr.mxu0 0.0
        %452 = vmatpush1.msra.mxu0 0.0
        %453 = vmatprep.subr.mxu0 0.0
        %454 = vmatpush1.msra.mxu0 0.0
        %455 = vmatprep.subr.mxu0 0.0
        %456 = vmatpush1.msra.mxu0 0.0
        %457 = vmatprep.subr.mxu0 0.0
        %458 = vmatpush1.msra.mxu0 0.0
        %459 = vmatprep.subr.mxu0 0.0
        %460 = vmatpush1.msra.mxu0 0.0
        %461 = vmatprep.subr.mxu0 0.0
        %462 = vmatpush1.msra.mxu0 0.0
        %463 = vmatprep.subr.mxu0 0.0
        %464 = vmatpush1.msra.mxu0 0.0
        %465 = vmatprep.subr.mxu0 0.0
        %466 = vmatpush1.msra.mxu0 0.0
        %467 = vmatprep.subr.mxu0 0.0
        %468 = vmatpush1.msra.mxu0 0.0
        %469 = vmatprep.subr.mxu0 0.0
        %470 = vmatpush1.msra.mxu0 0.0
        %471 = vmatprep.subr.mxu0 0.0
        %472 = vmatpush1.msra.mxu0 0.0
        %473 = vmatprep.subr.mxu0 0.0
        %474 = vmatpush1.msra.mxu0 0.0
        %475 = vmatprep.subr.mxu0 0.0
        %476 = vmatpush1.msra.mxu0 0.0
        %477 = vmatprep.subr.mxu0 0.0
        %478 = vmatpush1.msra.mxu0 0.0
        %479 = vmatprep.subr.mxu0 0.0
        %480 = vmatpush1.msra.mxu0 0.0
        %481 = vmatprep.mubr.f32.mxu0 0.0
        %482 = vmatmul.mubr.f32.gmra.mrb[0].mxu0 %v317
        %v483 = vpop.f32.mrb[0].mxu0
        %v484 = vadd.f32 0.0, %v483
        %v485 = vpop.f32.mrb[0].mxu0
        %486 = vmatprep.mubr.f32.mxu0 0.0
        %487 = vmatmul.mubr.f32.gmra.mrb[0].mxu0 %v320
        %v488 = vpop.f32.mrb[0].mxu0
        %v489 = vadd.f32 0.0, %v488
        %v490 = vpop.f32.mrb[0].mxu0
        %491 = vmatprep.mubr.f32.mxu0 0.0
        %492 = vmatmul.mubr.f32.gmra.mrb[0].mxu0 %v323
        %v493 = vpop.f32.mrb[0].mxu0
        %v494 = vadd.f32 0.0, %v493
        %v495 = vpop.f32.mrb[0].mxu0
        %496 = vmatprep.mubr.f32.mxu0 0.0
        %497 = vmatmul.mubr.f32.gmra.mrb[0].mxu0 %v326
        %v498 = vpop.f32.mrb[0].mxu0
        %v499 = vadd.f32 0.0, %v498
        %v500 = vpop.f32.mrb[0].mxu0
        %501 = vdwg.mxu0
        %502 = vst [vmem:[%s179] sm:$0xff] %v395
        %503 = vst [vmem:[%s179 + $0x8] sm:$0xff] %v397
        %504 = vst [vmem:[%s179 + $0x10] sm:$0xff] %v484
        %505 = vst [vmem:[%s179 + $0x18] sm:$0xff] %v401
        %506 = vst [vmem:[%s179 + $0x20] sm:$0xff] %v403
        %507 = vst [vmem:[%s179 + $0x28] sm:$0xff] %v489
        %508 = vst [vmem:[%s179 + $0x30] sm:$0xff] %v407
        %509 = vst [vmem:[%s179 + $0x38] sm:$0xff] %v409
        %510 = vst [vmem:[%s179 + $0x40] sm:$0xff] %v494
        %511 = vst [vmem:[%s179 + $0x48] sm:$0xff] %v413
        %512 = vst [vmem:[%s179 + $0x50] sm:$0xff] %v415
        %513 = vst [vmem:[%s179 + $0x58] sm:$0xff] %v499
        %s514 = sand.u32 %s94, 1
        %s515 = scalar_lea.sflag [#allocation4], %s514
        %s516 = sand.u32 %s94, 1
        %s517 = smul.addr %s516, 96
        %s518 = scalar_lea.vmem [#allocation5], %s517
        // Predicated region
        $region37: #{tpu_custom_call.1} parent=31 // pred_check
          %p519 = pneg %p104
        $region38: #{tpu_custom_call.1} parent=31 // pred_check_branch
          %521 = sbr.rel (%p519) target = $region40
        $region39: #{tpu_custom_call.1} parent=31 // pred_region
          %s522 = smul.u32 4, %s18
          %s524 = ssub.s32 1536, 1536
          %525 = vsyncadd %s515, %s524
          %s526 = smul.addr %s522, 3
          %s527 = smul.addr %s526, 128
          %s528 = scalar_lea.hbm %s3, %s527
          %s529 = sshll.u32 %s518, 4
          %s530 = int_to_ptr.vmem [resolvable:$true] %s529
          %535 = dma.vmem_to_hbm [thread:$0]  %s530, 1536, %s528, %s515, 384, 384, 24
        $region40: #{tpu_custom_call.1} parent=31 // pred_fallthru
          _
      $region32: #{tpu_custom_call.1} parent=5 // pred_fallthru
        _
      %p536 = scmp.le.s32.totalorder 2, %s13
      // Predicated region
      $region41: #{tpu_custom_call.1} parent=5 // pred_check
        %p537 = pneg %p536
      $region42: #{tpu_custom_call.1} parent=5 // pred_check_branch
        %539 = sbr.rel (%p537) target = $region44
      $region43: #{tpu_custom_call.1} parent=5 // pred_region
        %s540 = ssub.s32 %s13, 2
        // Predicated region
        $region45: #{tpu_custom_call.1} parent=43 // pred_check
          %p541 = pneg %p110
        $region46: #{tpu_custom_call.1} parent=43 // pred_check_branch
          %543 = sbr.rel (%p541) target = $region48
        $region47: #{tpu_custom_call.1} parent=43 // pred_region
          %s544 = sand.u32 %s95, 1
          %s545 = scalar_lea.sflag [#allocation4], %s544
          %s546 = sand.u32 %s95, 1
          %s547 = smul.addr %s546, 96
          %s548 = scalar_lea.vmem [#allocation5], %s547
          %549 = dma.done %s545, 1536
        $region48: #{tpu_custom_call.1} parent=43 // pred_fallthru
          _
      $region44: #{tpu_custom_call.1} parent=5 // pred_fallthru
        _
    $region6: #{tpu_custom_call.1} parent=1 // loop_footer
      %s17 = sadd.s32 1, %s13
    $region7: #{tpu_custom_call.1} parent=1 // loop_footer_branch
      %12 = sbr.rel target = $region3
    $region8: #{tpu_custom_call.1} parent=1 // loop_exit
      _
    %550 = vsyncpa [#allocation3], 1
    %s551 = scalar_lea.sflag [#allocation3], 1
    %552 = vsyncpa %s551, 1
    %553 = vsyncpa [#allocation4], 1
    %s554 = scalar_lea.sflag [#allocation4], 1
    %555 = vsyncpa %s554, 1

</llo_original>
